<compile_context>
chip_gen: v7x
topology: tpu7x:2x2x1
jax: 0.10.0
libtpu: 0.0.40
codegen_flags: <defaults>
</compile_context>

<pallas_src>
import functools

import jax
import jax.numpy as jnp
import numpy as np
from jax.experimental import pallas as pl
from jax.experimental.pallas import tpu as pltpu

_LANES = 128


def _shift_flat(x2d, s):
    """Neighbour fetch on the row-major flattening of ``x2d`` (rows, 128).

    Returns y with y[r, l] = flat(x2d)[(r*128 + l + s) mod size].  Positions
    whose true neighbour lies outside their own frame (or the block) wrap to
    arbitrary data; callers mask them out.  The lane part of the shift is a
    full-width lane rotation (two static lane slices + concat, the same
    machinery a lane rotate lowers to) plus a one-row carry, so every
    downstream op stays (rows, 128) dense.
    """
    rows, lanes = x2d.shape
    rs, ls = divmod(s, lanes)

    def rot_rows(v, k):
        k = k % rows
        if k == 0:
            return v
        return jnp.concatenate([v[k:, :], v[:k, :]], axis=0)

    def rot_lanes(v, k):
        if k == 0:
            return v
        return jnp.concatenate([v[:, k:], v[:, :k]], axis=1)

    if ls == 0:
        return rot_rows(x2d, rs)
    a = rot_lanes(rot_rows(x2d, rs), ls)      # source: row r+rs,   lane l+ls
    b = rot_lanes(rot_rows(x2d, rs + 1), ls)  # source: row r+rs+1, lane l+ls-128
    lane = jax.lax.broadcasted_iota(jnp.int32, (rows, lanes), 1)
    return jnp.where(lane < lanes - ls, a, b)


def _multi_loss_kernel(out_ref, tgt_ref, part_ref, *, H, W, N, pair):
    """One grid step = T samples.

    out_ref:  (T, 3, Rp, 128)  three output frames per sample, flat spatial
    tgt_ref:  (T, 1, Rp, 128)  one target frame per sample
    part_ref: (1, 1, 128)      lane-resident partial row (wrapper reduces)
    N = C*H*W (unpadded per-frame element count); Rp*128 >= N.
    """
    T, _, Rp, LANES = out_ref.shape
    HW = H * W
    C = N // HW

    inv_n = 1.0 / float(N)                    # per-frame MSE normalizer
    c_xsq = (4.0 if pair else 1.0) * inv_n    # pairwise term folds into s2
    c_ts1 = -2.0 * inv_n
    c_tsq = 3.0 * inv_n
    c_dh = 2.0e-4 / (3.0 * float(C * (H - 1) * W))   # 1e-4 * TVLoss coeffs
    c_dw = 2.0e-4 / (3.0 * float(C * H * (W - 1)))

    x_in = out_ref[...]                       # (T, 3, Rp, 128) input dtype
    t_in = tgt_ref[...]                       # (T, 1, Rp, 128)

    # --- MSE terms (algebraic rewrite; accumulation in f32) ---------------
    #   sum_k |x_k - t|^2       = s2 - 2*t*s1 + 3*t^2
    #   sum_{k<l} |x_k - x_l|^2 = 3*s2 - s1^2        (epoch >= 5 only)
    x0 = x_in[:, 0].astype(jnp.float32)
    x1 = x_in[:, 1].astype(jnp.float32)
    x2 = x_in[:, 2].astype(jnp.float32)
    t0 = t_in[:, 0].astype(jnp.float32)
    s1 = x0 + x1 + x2
    s2 = x0 * x0 + x1 * x1 + x2 * x2
    main = c_xsq * s2 + c_ts1 * (t0 * s1) + c_tsq * (t0 * t0)
    if pair:                                  # trace-time static branch
        main = main - inv_n * (s1 * s1)
    contrib = jnp.sum(main, axis=0)           # (Rp, 128)  VPU adds over T

    # --- TV terms (lane-resident; neighbours at flat offsets +W and +1) ---
    # bf16 inputs: differences stay in bf16; squares/accumulation in f32.
    x2d = x_in.reshape(T * 3 * Rp, LANES)
    dh = (_shift_flat(x2d, W) - x2d).astype(jnp.float32)
    dw = (_shift_flat(x2d, 1) - x2d).astype(jnp.float32)

    row = jax.lax.broadcasted_iota(jnp.int32, (Rp, LANES), 0)
    lane = jax.lax.broadcasted_iota(jnp.int32, (Rp, LANES), 1)
    p = row * LANES + lane                    # flat index within one frame
    in_frame = p < N                          # excludes the 128-pad tail
    h_ok = jnp.logical_and(p % HW < (H - 1) * W, in_frame)[None, None]
    w_ok = jnp.logical_and(p % W != W - 1, in_frame)[None, None]

    dh4 = dh.reshape(T, 3, Rp, LANES)
    dw4 = dw.reshape(T, 3, Rp, LANES)
    dh2 = jnp.where(h_ok, dh4 * dh4, 0.0)
    dw2 = jnp.where(w_ok, dw4 * dw4, 0.0)
    contrib = (contrib
               + c_dh * jnp.sum(dh2, axis=(0, 1))
               + c_dw * jnp.sum(dw2, axis=(0, 1)))          # (Rp, 128)

    part_ref[...] = jnp.sum(contrib, axis=0, keepdims=True).reshape(1, 1, LANES)


@functools.lru_cache(maxsize=None)
def _vmem_capacity_and_cores():
    """(physical VMEM bytes, TensorCores per chip).

    v5e / v6e: 128 MiB VMEM, 1 TensorCore.  v7x: 64 MiB per TC, 2 TCs.
    Falls back to the conservative (64 MiB, 2) if the query is unavailable.
    """
    try:
        cap = int(pltpu.get_tpu_info().vmem_capacity_bytes)
    except Exception:
        cap = 64 * 1024 * 1024
    if cap >= 96 * 1024 * 1024:
        return cap, 1
    return cap, 2


def _choose_tiling(batch_size, rows_padded, in_itemsize):
    """Pick samples-per-step T, grid size G, and vmem_limit_bytes."""
    cap, n_cores = _vmem_capacity_and_cores()
    # Padding-aware per-sample working set: double-buffered input blocks in
    # the input dtype plus ~24 frame-sized f32 temporaries inside the kernel.
    plane = (-(-rows_padded // 8) * 8) * _LANES
    bytes_per_sample = 2 * 4 * plane * in_itemsize + 24 * plane * 4
    if cap >= 96 * 1024 * 1024:        # v5e / v6e: big blocks, single core
        budget, vmem_limit = 56 * 1024 * 1024, 100 * 1024 * 1024
    else:                              # v7x-like: 64 MiB per TensorCore
        budget, vmem_limit = 24 * 1024 * 1024, 52 * 1024 * 1024
    cap_t = max(1, budget // bytes_per_sample)

    divisors = [d for d in range(1, batch_size + 1) if batch_size % d == 0]
    fitting = [d for d in divisors if d <= cap_t] or [1]
    if n_cores > 1 and batch_size > 1:
        # Keep >= 2 grid steps so the "parallel" axis can shard across both
        # TensorCores, preferring an even step count for load balance.
        balanced = [d for d in fitting if (batch_size // d) % n_cores == 0]
        multi = [d for d in fitting if batch_size // d >= n_cores]
        pick_from = balanced or multi or fitting
    else:
        pick_from = fitting
    t = max(pick_from)
    # TODO(synk): add an inner spatial (Rp) grid axis with a W-lane halo so a
    # single sample that exceeds the VMEM budget can still be tiled.
    return t, batch_size // t, vmem_limit


@functools.partial(jax.jit, static_argnames=("batch_size", "epoch"))
def multi_loss_pallas(output, target, batch_size, epoch):
    """output: (3*batch_size, C, H, W); target: (batch_size, C, H, W).

    `epoch` is a static Python int (mirrors the PyTorch module's argument).
    Returns a scalar f32 loss.
    """
    B = batch_size
    _, C, H, W = target.shape
    N = C * H * W
    Rp = -(-N // _LANES)                 # rows of 128 lanes per frame
    Npad = Rp * _LANES

    # Sublane-dense presentation: each frame flattened to (Rp, 128).  The
    # reshape is free; the pad only triggers when C*H*W % 128 != 0.
    out_flat = output.reshape(B, 3, N)
    tgt_flat = target.reshape(B, 1, N)
    if Npad != N:
        out_flat = jnp.pad(out_flat, ((0, 0), (0, 0), (0, Npad - N)))
        tgt_flat = jnp.pad(tgt_flat, ((0, 0), (0, 0), (0, Npad - N)))
    out_r = out_flat.reshape(B, 3, Rp, _LANES)
    tgt_r = tgt_flat.reshape(B, 1, Rp, _LANES)

    T, G, vmem_limit = _choose_tiling(B, Rp, jnp.dtype(output.dtype).itemsize)

    kernel = functools.partial(_multi_loss_kernel, H=H, W=W, N=N,
                               pair=bool(epoch >= 5))

    grid_spec = pltpu.PrefetchScalarGridSpec(
        num_scalar_prefetch=0,
        grid=(G,),
        in_specs=[
            pl.BlockSpec((T, 3, Rp, _LANES), lambda i: (i, 0, 0, 0)),
            pl.BlockSpec((T, 1, Rp, _LANES), lambda i: (i, 0, 0, 0)),
        ],
        out_specs=pl.BlockSpec((1, 1, _LANES), lambda i: (i, 0, 0)),
    )

    partials = pl.pallas_call(
        kernel,
        grid_spec=grid_spec,
        out_shape=jax.ShapeDtypeStruct((G, 1, _LANES), jnp.float32),
        compiler_params=pltpu.CompilerParams(
            dimension_semantics=("parallel",),
            vmem_limit_bytes=vmem_limit,
        ),
    )(out_r, tgt_r)

    # Deferred cross-lane reduction + final 1/batch_size (tiny XLA op).
    return jnp.sum(partials) / jnp.float32(B)


def multi_loss_reference(output, target, batch_size, epoch):
    """Pure-JAX re-implementation of the PyTorch Multi_loss forward."""
    def mse(a, b):
        return jnp.mean((a - b) ** 2)

    def tvloss(x):
        b, c, h, w = x.shape
        count_h = c * (h - 1) * w
        count_w = c * h * (w - 1)
        h_tv = jnp.sum((x[:, :, 1:, :] - x[:, :, : h - 1, :]) ** 2)
        w_tv = jnp.sum((x[:, :, :, 1:] - x[:, :, :, : w - 1]) ** 2)
        return 2.0 * (h_tv / count_h + w_tv / count_w) / b

    loss = jnp.float32(0.0)
    for i in range(batch_size):
        o0, o1, o2 = output[3 * i], output[3 * i + 1], output[3 * i + 2]
        t = target[i]
        loss += (
            mse(o0, t) + mse(o1, t) + mse(o2, t)
            + 1e-4 * tvloss(output[3 * i: 3 * i + 3])
        )
        if epoch >= 5:
            loss += mse(o0, o1) + mse(o0, o2) + mse(o1, o2)
    return loss / batch_size


if __name__ == "__main__":
    batch_size = 2
    C, H, W = 4, 16, 16

    key = jax.random.PRNGKey(0)
    k_out, k_tgt = jax.random.split(key)
    output = jax.random.normal(k_out, (3 * batch_size, C, H, W), dtype=jnp.float32)
    target = jax.random.normal(k_tgt, (batch_size, C, H, W), dtype=jnp.float32)

    ok = True
    for epoch in (0, 10):  # epoch < 5 branch and epoch >= 5 branch
        got = multi_loss_pallas(output, target, batch_size=batch_size, epoch=epoch)
        got = jax.block_until_ready(got)
        want = multi_loss_reference(output, target, batch_size, epoch)
        if not np.allclose(np.asarray(got), np.asarray(want), rtol=1e-4, atol=1e-5):
            ok = False
            print(f"MISMATCH epoch={epoch}: got={got}, want={want}")

    if ok:
        print("KERNEL_OK")
</pallas_src>

<mosaic_0001>
module attributes {stable_mosaic.version = 11 : i64} {
  func.func @_multi_loss_kernel(%arg0: i32, %arg1: memref<1x3x8x128xf32, #tpu.memory_space<vmem>>, %arg2: memref<1x1x8x128xf32, #tpu.memory_space<vmem>>, %arg3: memref<1x1x128xf32, #tpu.memory_space<vmem>>) attributes {dimension_semantics = [#tpu.dimension_semantics<parallel>], iteration_bounds = array<i64: 2>, scalar_prefetch = 0 : i64, scratch_operands = 0 : i64, tpu.core_type = #tpu.core_type<tc>, window_params = [{transform_indices = @transform_0, window_bounds = array<i64: 1, 3, 8, 128>}, {transform_indices = @transform_1, window_bounds = array<i64: 1, 1, 8, 128>}, {transform_indices = @transform_2, window_bounds = array<i64: 1, 1, 128>}]} {
    %c0 = arith.constant 0 : index
    %c0_0 = arith.constant 0 : index
    %c0_1 = arith.constant 0 : index
    %c0_2 = arith.constant 0 : index
    %0 = vector.load %arg1[%c0, %c0_0, %c0_1, %c0_2] : memref<1x3x8x128xf32, #tpu.memory_space<vmem>>, vector<1x3x8x128xf32>
    %c0_3 = arith.constant 0 : index
    %c0_4 = arith.constant 0 : index
    %c0_5 = arith.constant 0 : index
    %c0_6 = arith.constant 0 : index
    %1 = vector.load %arg2[%c0_3, %c0_4, %c0_5, %c0_6] : memref<1x1x8x128xf32, #tpu.memory_space<vmem>>, vector<1x1x8x128xf32>
    %2 = vector.extract_strided_slice %0 {offsets = [0, 0, 0, 0], sizes = [1, 1, 8, 128], strides = [1, 1, 1, 1]} : vector<1x3x8x128xf32> to vector<1x1x8x128xf32>
    %3 = vector.shape_cast %2 : vector<1x1x8x128xf32> to vector<1x8x128xf32>
    %4 = vector.extract_strided_slice %0 {offsets = [0, 1, 0, 0], sizes = [1, 1, 8, 128], strides = [1, 1, 1, 1]} : vector<1x3x8x128xf32> to vector<1x1x8x128xf32>
    %5 = vector.shape_cast %4 : vector<1x1x8x128xf32> to vector<1x8x128xf32>
    %6 = vector.extract_strided_slice %0 {offsets = [0, 2, 0, 0], sizes = [1, 1, 8, 128], strides = [1, 1, 1, 1]} : vector<1x3x8x128xf32> to vector<1x1x8x128xf32>
    %7 = vector.shape_cast %6 : vector<1x1x8x128xf32> to vector<1x8x128xf32>
    %8 = vector.shape_cast %1 : vector<1x1x8x128xf32> to vector<1x8x128xf32>
    %9 = arith.addf %3, %5 : vector<1x8x128xf32>
    %10 = arith.addf %9, %7 : vector<1x8x128xf32>
    %11 = arith.mulf %3, %3 : vector<1x8x128xf32>
    %12 = arith.mulf %5, %5 : vector<1x8x128xf32>
    %13 = arith.addf %11, %12 : vector<1x8x128xf32>
    %14 = arith.mulf %7, %7 : vector<1x8x128xf32>
    %15 = arith.addf %13, %14 : vector<1x8x128xf32>
    %cst = arith.constant 9.765625E-4 : f32
    %16 = vector.broadcast %cst : f32 to vector<1x8x128xf32>
    %17 = arith.mulf %16, %15 : vector<1x8x128xf32>
    %18 = arith.mulf %8, %10 : vector<1x8x128xf32>
    %cst_7 = arith.constant -0.001953125 : f32
    %19 = vector.broadcast %cst_7 : f32 to vector<1x8x128xf32>
    %20 = arith.mulf %19, %18 : vector<1x8x128xf32>
    %21 = arith.addf %17, %20 : vector<1x8x128xf32>
    %22 = arith.mulf %8, %8 : vector<1x8x128xf32>
    %cst_8 = arith.constant 0.0029296875 : f32
    %23 = vector.broadcast %cst_8 : f32 to vector<1x8x128xf32>
    %24 = arith.mulf %23, %22 : vector<1x8x128xf32>
    %25 = arith.addf %21, %24 : vector<1x8x128xf32>
    %cst_9 = arith.constant dense<0.000000e+00> : vector<8x128xf32>
    %26 = vector.multi_reduction <add>, %25, %cst_9 [0] : vector<1x8x128xf32> to vector<8x128xf32>
    %27 = vector.shape_cast %0 : vector<1x3x8x128xf32> to vector<24x128xf32>
    %28 = vector.extract_strided_slice %27 {offsets = [0, 16], sizes = [24, 112], strides = [1, 1]} : vector<24x128xf32> to vector<24x112xf32>
    %29 = vector.extract_strided_slice %27 {offsets = [0, 0], sizes = [24, 16], strides = [1, 1]} : vector<24x128xf32> to vector<24x16xf32>
    %30 = tpu.concatenate %28, %29 in 1 : vector<24x112xf32>, vector<24x16xf32> -> vector<24x128xf32>
    %31 = vector.extract_strided_slice %27 {offsets = [1, 0], sizes = [23, 128], strides = [1, 1]} : vector<24x128xf32> to vector<23x128xf32>
    %32 = vector.extract_strided_slice %27 {offsets = [0, 0], sizes = [1, 128], strides = [1, 1]} : vector<24x128xf32> to vector<1x128xf32>
    %33 = tpu.concatenate %31, %32 in 0 : vector<23x128xf32>, vector<1x128xf32> -> vector<24x128xf32>
    %34 = vector.extract_strided_slice %33 {offsets = [0, 16], sizes = [24, 112], strides = [1, 1]} : vector<24x128xf32> to vector<24x112xf32>
    %35 = vector.extract_strided_slice %33 {offsets = [0, 0], sizes = [24, 16], strides = [1, 1]} : vector<24x128xf32> to vector<24x16xf32>
    %36 = tpu.concatenate %34, %35 in 1 : vector<24x112xf32>, vector<24x16xf32> -> vector<24x128xf32>
    %37 = tpu.iota {dimensions = array<i32: 1>} : vector<24x128xi32>
    %c112_i32 = arith.constant 112 : i32
    %38 = vector.broadcast %c112_i32 : i32 to vector<24x128xi32>
    %39 = arith.cmpi slt, %37, %38 : vector<24x128xi32>
    %40 = arith.select %39, %30, %36 : vector<24x128xi1>, vector<24x128xf32>
    %41 = arith.subf %40, %27 : vector<24x128xf32>
    %42 = vector.extract_strided_slice %27 {offsets = [0, 1], sizes = [24, 127], strides = [1, 1]} : vector<24x128xf32> to vector<24x127xf32>
    %43 = vector.extract_strided_slice %27 {offsets = [0, 0], sizes = [24, 1], strides = [1, 1]} : vector<24x128xf32> to vector<24x1xf32>
    %44 = tpu.concatenate %42, %43 in 1 : vector<24x127xf32>, vector<24x1xf32> -> vector<24x128xf32>
    %45 = vector.extract_strided_slice %27 {offsets = [1, 0], sizes = [23, 128], strides = [1, 1]} : vector<24x128xf32> to vector<23x128xf32>
    %46 = vector.extract_strided_slice %27 {offsets = [0, 0], sizes = [1, 128], strides = [1, 1]} : vector<24x128xf32> to vector<1x128xf32>
    %47 = tpu.concatenate %45, %46 in 0 : vector<23x128xf32>, vector<1x128xf32> -> vector<24x128xf32>
    %48 = vector.extract_strided_slice %47 {offsets = [0, 1], sizes = [24, 127], strides = [1, 1]} : vector<24x128xf32> to vector<24x127xf32>
    %49 = vector.extract_strided_slice %47 {offsets = [0, 0], sizes = [24, 1], strides = [1, 1]} : vector<24x128xf32> to vector<24x1xf32>
    %50 = tpu.concatenate %48, %49 in 1 : vector<24x127xf32>, vector<24x1xf32> -> vector<24x128xf32>
    %51 = tpu.iota {dimensions = array<i32: 1>} : vector<24x128xi32>
    %c127_i32 = arith.constant 127 : i32
    %52 = vector.broadcast %c127_i32 : i32 to vector<24x128xi32>
    %53 = arith.cmpi slt, %51, %52 : vector<24x128xi32>
    %54 = arith.select %53, %44, %50 : vector<24x128xi1>, vector<24x128xf32>
    %55 = arith.subf %54, %27 : vector<24x128xf32>
    %56 = tpu.iota {dimensions = array<i32: 0>} : vector<8x128xi32>
    %57 = tpu.iota {dimensions = array<i32: 1>} : vector<8x128xi32>
    %c128_i32 = arith.constant 128 : i32
    %58 = vector.broadcast %c128_i32 : i32 to vector<8x128xi32>
    %59 = arith.muli %56, %58 : vector<8x128xi32>
    %60 = arith.addi %59, %57 : vector<8x128xi32>
    %c1024_i32 = arith.constant 1024 : i32
    %61 = vector.broadcast %c1024_i32 : i32 to vector<8x128xi32>
    %62 = arith.cmpi slt, %60, %61 : vector<8x128xi32>
    %c256_i32 = arith.constant 256 : i32
    %c0_i32 = arith.constant 0 : i32
    %63 = arith.cmpi eq, %c256_i32, %c0_i32 : i32
    %c1_i32 = arith.constant 1 : i32
    %64 = arith.select %63, %c1_i32, %c256_i32 : i32
    %65 = vector.broadcast %64 : i32 to vector<8x128xi32>
    %66 = arith.remsi %60, %65 : vector<8x128xi32>
    %c0_i32_10 = arith.constant 0 : i32
    %67 = vector.broadcast %c0_i32_10 : i32 to vector<8x128xi32>
    %68 = arith.cmpi ne, %66, %67 : vector<8x128xi32>
    %c0_i32_11 = arith.constant 0 : i32
    %69 = vector.broadcast %c0_i32_11 : i32 to vector<8x128xi32>
    %70 = arith.cmpi slt, %66, %69 : vector<8x128xi32>
    %c0_i32_12 = arith.constant 0 : i32
    %71 = arith.cmpi slt, %64, %c0_i32_12 : i32
    %72 = vector.broadcast %71 : i1 to vector<8x128xi1>
    %73 = vector.broadcast %72 : vector<8x128xi1> to vector<8x128xi1>
    %74 = arith.xori %70, %73 : vector<8x128xi1>
    %75 = arith.andi %74, %68 : vector<8x128xi1>
    %76 = vector.broadcast %64 : i32 to vector<8x128xi32>
    %77 = arith.addi %66, %76 : vector<8x128xi32>
    %78 = arith.select %75, %77, %66 : vector<8x128xi1>, vector<8x128xi32>
    %c240_i32 = arith.constant 240 : i32
    %79 = vector.broadcast %c240_i32 : i32 to vector<8x128xi32>
    %80 = arith.cmpi slt, %78, %79 : vector<8x128xi32>
    %81 = arith.andi %80, %62 : vector<8x128xi1>
    %82 = vector.shape_cast %81 : vector<8x128xi1> to vector<1x1x8x128xi1>
    %c16_i32 = arith.constant 16 : i32
    %c0_i32_13 = arith.constant 0 : i32
    %83 = arith.cmpi eq, %c16_i32, %c0_i32_13 : i32
    %c1_i32_14 = arith.constant 1 : i32
    %84 = arith.select %83, %c1_i32_14, %c16_i32 : i32
    %85 = vector.broadcast %84 : i32 to vector<8x128xi32>
    %86 = arith.remsi %60, %85 : vector<8x128xi32>
    %c0_i32_15 = arith.constant 0 : i32
    %87 = vector.broadcast %c0_i32_15 : i32 to vector<8x128xi32>
    %88 = arith.cmpi ne, %86, %87 : vector<8x128xi32>
    %c0_i32_16 = arith.constant 0 : i32
    %89 = vector.broadcast %c0_i32_16 : i32 to vector<8x128xi32>
    %90 = arith.cmpi slt, %86, %89 : vector<8x128xi32>
    %c0_i32_17 = arith.constant 0 : i32
    %91 = arith.cmpi slt, %84, %c0_i32_17 : i32
    %92 = vector.broadcast %91 : i1 to vector<8x128xi1>
    %93 = vector.broadcast %92 : vector<8x128xi1> to vector<8x128xi1>
    %94 = arith.xori %90, %93 : vector<8x128xi1>
    %95 = arith.andi %94, %88 : vector<8x128xi1>
    %96 = vector.broadcast %84 : i32 to vector<8x128xi32>
    %97 = arith.addi %86, %96 : vector<8x128xi32>
    %98 = arith.select %95, %97, %86 : vector<8x128xi1>, vector<8x128xi32>
    %c15_i32 = arith.constant 15 : i32
    %99 = vector.broadcast %c15_i32 : i32 to vector<8x128xi32>
    %100 = arith.cmpi ne, %98, %99 : vector<8x128xi32>
    %101 = arith.andi %100, %62 : vector<8x128xi1>
    %102 = vector.shape_cast %101 : vector<8x128xi1> to vector<1x1x8x128xi1>
    %103 = vector.shape_cast %41 : vector<24x128xf32> to vector<1x3x8x128xf32>
    %104 = vector.shape_cast %55 : vector<24x128xf32> to vector<1x3x8x128xf32>
    %105 = arith.mulf %103, %103 : vector<1x3x8x128xf32>
    %cst_18 = arith.constant 0.000000e+00 : f32
    %106 = vector.shape_cast %82 : vector<1x1x8x128xi1> to vector<1x1x8x128xi1>
    %107 = vector.broadcast %106 : vector<1x1x8x128xi1> to vector<1x3x8x128xi1>
    %108 = vector.broadcast %cst_18 : f32 to vector<1x3x8x128xf32>
    %109 = arith.select %107, %105, %108 : vector<1x3x8x128xi1>, vector<1x3x8x128xf32>
    %110 = arith.mulf %104, %104 : vector<1x3x8x128xf32>
    %cst_19 = arith.constant 0.000000e+00 : f32
    %111 = vector.shape_cast %102 : vector<1x1x8x128xi1> to vector<1x1x8x128xi1>
    %112 = vector.broadcast %111 : vector<1x1x8x128xi1> to vector<1x3x8x128xi1>
    %113 = vector.broadcast %cst_19 : f32 to vector<1x3x8x128xf32>
    %114 = arith.select %112, %110, %113 : vector<1x3x8x128xi1>, vector<1x3x8x128xf32>
    %cst_20 = arith.constant dense<0.000000e+00> : vector<8x128xf32>
    %115 = vector.multi_reduction <add>, %109, %cst_20 [0, 1] : vector<1x3x8x128xf32> to vector<8x128xf32>
    %cst_21 = arith.constant 6.94444466E-8 : f32
    %116 = vector.broadcast %cst_21 : f32 to vector<8x128xf32>
    %117 = arith.mulf %116, %115 : vector<8x128xf32>
    %118 = arith.addf %26, %117 : vector<8x128xf32>
    %cst_22 = arith.constant dense<0.000000e+00> : vector<8x128xf32>
    %119 = vector.multi_reduction <add>, %114, %cst_22 [0, 1] : vector<1x3x8x128xf32> to vector<8x128xf32>
    %cst_23 = arith.constant 6.94444466E-8 : f32
    %120 = vector.broadcast %cst_23 : f32 to vector<8x128xf32>
    %121 = arith.mulf %120, %119 : vector<8x128xf32>
    %122 = arith.addf %118, %121 : vector<8x128xf32>
    %cst_24 = arith.constant dense<0.000000e+00> : vector<128xf32>
    %123 = vector.multi_reduction <add>, %122, %cst_24 [0] : vector<8x128xf32> to vector<128xf32>
    %124 = vector.shape_cast %123 : vector<128xf32> to vector<1x128xf32>
    %125 = vector.shape_cast %124 : vector<1x128xf32> to vector<1x1x128xf32>
    %c0_25 = arith.constant 0 : index
    %c0_26 = arith.constant 0 : index
    %c0_27 = arith.constant 0 : index
    %126 = vector.load %arg3[%c0_25, %c0_26, %c0_27] : memref<1x1x128xf32, #tpu.memory_space<vmem>>, vector<1x1x128xf32>
    tpu.vector_store %arg3[%c0_25, %c0_26, %c0_27], %125 {strides = array<i32>} : memref<1x1x128xf32, #tpu.memory_space<vmem>>, vector<1x1x128xf32>,
    return
  }
  func.func @transform_0(%arg0: i32) -> (i32, i32, i32, i32) {
    %c0_i32 = arith.constant 0 : i32
    %c0_i32_0 = arith.constant 0 : i32
    %c0_i32_1 = arith.constant 0 : i32
    %c0_i32_2 = arith.constant 0 : i32
    return %arg0, %c0_i32, %c0_i32_0, %c0_i32_1 : i32, i32, i32, i32
  }
  func.func @transform_1(%arg0: i32) -> (i32, i32, i32, i32) {
    %c0_i32 = arith.constant 0 : i32
    %c0_i32_0 = arith.constant 0 : i32
    %c0_i32_1 = arith.constant 0 : i32
    %c0_i32_2 = arith.constant 0 : i32
    return %arg0, %c0_i32, %c0_i32_0, %c0_i32_1 : i32, i32, i32, i32
  }
  func.func @transform_2(%arg0: i32) -> (i32, i32, i32) {
    %c0_i32 = arith.constant 0 : i32
    %c0_i32_0 = arith.constant 0 : i32
    %c0_i32_1 = arith.constant 0 : i32
    return %arg0, %c0_i32, %c0_i32_0 : i32, i32, i32
  }
}

</mosaic_0001>

<llo_original>
// kernel: multi_loss_pallas.1
$region0: #{multi_loss_pallas.1}
  #allocation0 [shape = 'u32[]', space=smem, size = 0x4, offset = 0x4, fixed_abs, tag = 'smem constant byte address 0x4 - core index']
  #allocation1 [shape = 'u32[144,128]{1,0:T(1,128)}', space=vmem, size = 0x12000, scoped, tag = 'internal scratch']
  %s0 = inlined_call_operand.vmem [shape: f32[2,3,8,128], index: 0, kind: input, shape index: {}]
  %s1 = inlined_call_operand.vmem [shape: f32[2,1,8,128], index: 1, kind: input, shape index: {}]
  %s2 = inlined_call_operand.vmem [shape: f32[2,1,128], index: 2, kind: output, shape index: {}]
  %s3 = sld [smem:[#allocation0]]
  $region41: #{multi_loss_pallas.1} parent=0
    _
  %s5 = ssub.s32 1, %s3
  %s6 = scalar_select 0, %s5, %s3
  loop: start=0, step=1, limit=4
  $region2: #{multi_loss_pallas.1} parent=0 // loop_pre_header
    _
  $region3: #{multi_loss_pallas.1} parent=0 // loop_header
    %s8 = sphi 0, %s12
    %p9 = scmp.ge.s32.totalorder %s8, 4
    %s18 = sphi 0, %s20
    %s21 = sphi 0, %s18
    %s22 = sphi 0, %s21
    %s38 = sphi 0, %s22
    %s44 = sphi 0, %s46
    %s47 = sphi 0, %s44
    %s48 = sphi 0, %s47
    %s64 = sphi 0, %s48
    %s70 = sphi 0, %s72
    %s73 = sphi 0, %s70
    %s74 = sphi 0, %s73
    %s90 = sphi 0, %s74
  $region4: #{multi_loss_pallas.1} parent=0 // loop_header_branch
    %11 = sbr.rel (%p9) target = $region8
  $region5: #{multi_loss_pallas.1} parent=0 // loop_body
    %s13 = ssub.s32 %s8, 1
    %s14 = ssub.s32 %s8, 2
    %s15 = sadd.s32 %s8, 1
    %s16 = ssub.s32 %s8, %s15
    %p17 = scmp.eq.s32.totalorder %s16, 0
    %s19 = sadd.s32 %s18, 1
    %s20 = scalar_select %p17, %s18, %s19
    %p23 = pneg %p17
    %p24 = scmp.eq.s32.totalorder %s8, 1
    %p25 = por %p23, %p24
    %p26 = scmp.ne.s32.totalorder %s18, %s21
    %p27 = scmp.eq.s32.totalorder %s8, 0
    %p28 = por %p26, %p27
    %p29 = scmp.ne.s32.totalorder %s18, %s21
    %p30 = scmp.eq.s32.totalorder %s13, 1
    %p31 = por %p29, %p30
    %p32 = scmp.ne.s32.totalorder %s21, %s22
    %p33 = scmp.eq.s32.totalorder %s13, 0
    %p34 = por %p32, %p33
    %p35 = scmp.ne.s32.totalorder %s21, %s22
    %p36 = scmp.eq.s32.totalorder %s14, 1
    %p37 = por %p35, %p36
    %p39 = scmp.ne.s32.totalorder %s22, %s38
    %p40 = scmp.eq.s32.totalorder %s14, 0
    %p41 = por %p39, %p40
    %s42 = ssub.s32 %s8, %s15
    %p43 = scmp.eq.s32.totalorder %s42, 0
    %s45 = sadd.s32 %s44, 1
    %s46 = scalar_select %p43, %s44, %s45
    %p49 = pneg %p43
    %p50 = scmp.eq.s32.totalorder %s8, 1
    %p51 = por %p49, %p50
    %p52 = scmp.ne.s32.totalorder %s44, %s47
    %p53 = scmp.eq.s32.totalorder %s8, 0
    %p54 = por %p52, %p53
    %p55 = scmp.ne.s32.totalorder %s44, %s47
    %p56 = scmp.eq.s32.totalorder %s13, 1
    %p57 = por %p55, %p56
    %p58 = scmp.ne.s32.totalorder %s47, %s48
    %p59 = scmp.eq.s32.totalorder %s13, 0
    %p60 = por %p58, %p59
    %p61 = scmp.ne.s32.totalorder %s47, %s48
    %p62 = scmp.eq.s32.totalorder %s14, 1
    %p63 = por %p61, %p62
    %p65 = scmp.ne.s32.totalorder %s48, %s64
    %p66 = scmp.eq.s32.totalorder %s14, 0
    %p67 = por %p65, %p66
    %s68 = ssub.s32 %s8, %s15
    %p69 = scmp.eq.s32.totalorder %s68, 0
    %s71 = sadd.s32 %s70, 1
    %s72 = scalar_select %p69, %s70, %s71
    %p75 = pneg %p69
    %p76 = scmp.eq.s32.totalorder %s8, 1
    %p77 = por %p75, %p76
    %p78 = scmp.ne.s32.totalorder %s70, %s73
    %p79 = scmp.eq.s32.totalorder %s8, 0
    %p80 = por %p78, %p79
    %p81 = scmp.ne.s32.totalorder %s70, %s73
    %p82 = scmp.eq.s32.totalorder %s13, 1
    %p83 = por %p81, %p82
    %p84 = scmp.ne.s32.totalorder %s73, %s74
    %p85 = scmp.eq.s32.totalorder %s13, 0
    %p86 = por %p84, %p85
    %p87 = scmp.ne.s32.totalorder %s73, %s74
    %p88 = scmp.eq.s32.totalorder %s14, 1
    %p89 = por %p87, %p88
    %p91 = scmp.ne.s32.totalorder %s74, %s90
    %p92 = scmp.eq.s32.totalorder %s14, 0
    %p93 = por %p91, %p92
    %p94 = scmp.le.s32.totalorder 1, %s8
    %p95 = scmp.lt.s32.totalorder %s8, 3
    %p96 = pnand %p94, %p95
    %p97 = pneg %p96
    // Predicated region
    $region9: #{multi_loss_pallas.1} parent=5 // pred_check
      _
    $region10: #{multi_loss_pallas.1} parent=5 // pred_check_branch
      %99 = sbr.rel (%p96) target = $region12
    $region11: #{multi_loss_pallas.1} parent=5 // pred_region
      %s100 = ssub.s32 %s8, 1
    $region12: #{multi_loss_pallas.1} parent=5 // pred_fallthru
      _
    %p101 = scmp.lt.s32.totalorder %s8, 2
    // Predicated region
    $region13: #{multi_loss_pallas.1} parent=5 // pred_check
      %p102 = pneg %p101
    $region14: #{multi_loss_pallas.1} parent=5 // pred_check_branch
      %104 = sbr.rel (%p102) target = $region16
    $region15: #{multi_loss_pallas.1} parent=5 // pred_region
      // Predicated region
      $region17: #{multi_loss_pallas.1} parent=15 // pred_check
        %p105 = pneg %p28
      $region18: #{multi_loss_pallas.1} parent=15 // pred_check_branch
        %107 = sbr.rel (%p105) target = $region20
      $region19: #{multi_loss_pallas.1} parent=15 // pred_region
        %p108 = scmp.lt.s32.totalorder %s8, 1
        %s109 = scalar_select %p108, %s8, 1
        %s110 = smul.addr %s109, 3
        %s111 = smul.addr %s110, 8
        %s112 = scalar_lea.vmem %s0, %s111
      $region20: #{multi_loss_pallas.1} parent=15 // pred_fallthru
        _
      // Predicated region
      $region21: #{multi_loss_pallas.1} parent=15 // pred_check
        %p113 = pneg %p54
      $region22: #{multi_loss_pallas.1} parent=15 // pred_check_branch
        %115 = sbr.rel (%p113) target = $region24
      $region23: #{multi_loss_pallas.1} parent=15 // pred_region
        %p116 = scmp.lt.s32.totalorder %s8, 1
        %s117 = scalar_select %p116, %s8, 1
        %s118 = smul.addr %s117, 8
        %s119 = scalar_lea.vmem %s1, %s118
      $region24: #{multi_loss_pallas.1} parent=15 // pred_fallthru
        _
    $region16: #{multi_loss_pallas.1} parent=5 // pred_fallthru
      _
    %p120 = scmp.le.s32.totalorder 1, %s8
    %p121 = scmp.lt.s32.totalorder %s8, 3
    %p122 = pnand %p120, %p121
    %p123 = pneg %p122
    // Predicated region
    $region25: #{multi_loss_pallas.1} parent=5 // pred_check
      _
    $region26: #{multi_loss_pallas.1} parent=5 // pred_check_branch
      %125 = sbr.rel (%p122) target = $region28
    $region27: #{multi_loss_pallas.1} parent=5 // pred_region
      %s126 = ssub.s32 %s8, 1
      %p127 = scmp.lt.s32.totalorder %s13, 1
      %s128 = scalar_select %p127, %s13, 1
      %s129 = smul.addr %s128, 3
      %s130 = smul.addr %s129, 8
      %s131 = scalar_lea.vmem %s0, %s130
      %p132 = pneg %p34
      %p133 = pneg %p31
      %p134 = scmp.lt.s32.totalorder %s13, 1
      %s135 = scalar_select %p134, %s13, 1
      %s136 = smul.addr %s135, 8
      %s137 = scalar_lea.vmem %s1, %s136
      %p138 = pneg %p60
      %p139 = pneg %p57
      %p140 = pneg %p86
      %p141 = pneg %p83
      %p142 = scmp.lt.s32.totalorder %s13, 1
      %s143 = scalar_select %p142, %s13, 1
      %s144 = scalar_lea.vmem %s2, %s143
      %p145 = scmp.lt.s32.totalorder %s13, 1
      %s146 = scalar_select %p145, %s13, 1
      %s147 = smul.addr %s146, 3
      %s148 = smul.addr %s147, 8
      %s149 = scalar_lea.vmem %s0, %s148
      %p150 = scmp.lt.s32.totalorder %s13, 1
      %s151 = scalar_select %p150, %s13, 1
      %s152 = smul.addr %s151, 8
      %s153 = scalar_lea.vmem %s1, %s152
      %p154 = scmp.lt.s32.totalorder %s13, 1
      %s155 = scalar_select %p154, %s13, 1
      %s156 = scalar_lea.vmem %s2, %s155
      %v157 = vld [vmem:[%s149] sm:$0xff]
      %v158 = vld [vmem:[%s149 + $0x8] sm:$0xff]
      %v159 = vld [vmem:[%s149 + $0x10] sm:$0xff]
      %v160 = vld [vmem:[%s153] sm:$0xff]
      %v161 = vadd.f32 %v157, %v158
      %v162 = vadd.f32 %v161, %v159
      %v163 = vmul.f32 %v157, %v157
      %v164 = vmul.f32 %v158, %v158
      %v165 = vadd.f32 %v163, %v164
      %v166 = vmul.f32 %v159, %v159
      %v167 = vadd.f32 %v165, %v166
      %v168 = vmul.f32 %v167, 0.0009765625
      %v169 = vmul.f32 %v160, %v162
      %v170 = vmul.f32 %v169, -0.001953125
      %v171 = vadd.f32 %v168, %v170
      %v172 = vmul.f32 %v160, %v160
      %v173 = vmul.f32 %v172, 0.0029296875
      %v174 = vadd.f32 %v171, %v173
      %v175 = vadd.f32 %v174, 0.0
      %179 = vrot.lane.b32.xlu0 %v157, 112
      %v180 = vpop.permute.xlu0 %179
      %181 = vrot.lane.b32.xlu0 %v158, 112
      %v182 = vpop.permute.xlu0 %181
      %183 = vrot.lane.b32.xlu0 %v159, 112
      %v184 = vpop.permute.xlu0 %183
      %vm188 = vcmask 1046528
      %v189 = vrot.slane %v157, 1
      %v190 = vrot.slane %v158, 1
      %v191 = vsel %vm188, %v189, %v190
      %v192 = vrot.slane %v159, 1
      %v193 = vsel %vm188, %v190, %v192
      %v196 = vsel %vm188, %v192, %v189
      %198 = vrot.lane.b32.xlu0 %v191, 112
      %v199 = vpop.permute.xlu0 %198
      %200 = vrot.lane.b32.xlu0 %v193, 112
      %v201 = vpop.permute.xlu0 %200
      %202 = vrot.lane.b32.xlu0 %v196, 112
      %v203 = vpop.permute.xlu0 %202
      %v207 = vlaneseq
      %v208 = vand.u32 %v207, 127
      %vm209 = vcmp.lt.s32.totalorder %v208, 112
      %v210 = vsel %vm209, %v180, %v199
      %v211 = vsel %vm209, %v182, %v201
      %v212 = vsel %vm209, %v184, %v203
      %v213 = vsub.f32 %v210, %v157
      %v214 = vsub.f32 %v211, %v158
      %v215 = vsub.f32 %v212, %v159
      %216 = vrot.lane.b32.xlu0 %v157, 127
      %v217 = vpop.permute.xlu0 %216
      %218 = vrot.lane.b32.xlu0 %v158, 127
      %v219 = vpop.permute.xlu0 %218
      %220 = vrot.lane.b32.xlu0 %v159, 127
      %v221 = vpop.permute.xlu0 %220
      %225 = vrot.lane.b32.xlu0 %v191, 127
      %v226 = vpop.permute.xlu0 %225
      %227 = vrot.lane.b32.xlu0 %v193, 127
      %v228 = vpop.permute.xlu0 %227
      %229 = vrot.lane.b32.xlu0 %v196, 127
      %v230 = vpop.permute.xlu0 %229
      %vm234 = vcmp.lt.s32.totalorder %v208, 127
      %v235 = vsel %vm234, %v217, %v226
      %v236 = vsel %vm234, %v219, %v228
      %v237 = vsel %vm234, %v221, %v230
      %v238 = vsub.f32 %v235, %v157
      %v239 = vsub.f32 %v236, %v158
      %v240 = vsub.f32 %v237, %v159
      %v241 = vlaneseq
      %v242 = vshrl.u32 %v241, 7
      %v243 = vmul.u32 %v242, 128
      %v244 = vadd.s32 %v243, %v208
      %vm245 = vcmp.lt.s32.totalorder %v244, 1024
      %vm246 = vcmp.lt.s32.totalorder %v244, 0
      %v247 = vsub.s32 0, %v244
      %v248 = vsel %vm246, %v247, %v244
      %v249 = vshrl.u32 %v248, 8
      %v250 = vand.u32 %v248, 255
      %v251 = vsub.s32 0, %v250
      %v252 = vsel %vm246, %v251, %v250
      %vm253 = vcmp.ne.s32.totalorder %v252, 0
      %vm254 = vcmp.lt.s32.totalorder %v252, 0
      %vm255 = vmand %vm254, %vm253
      %v256 = vadd.s32 %v252, 256
      %v257 = vsel %vm255, %v256, %v252
      %vm258 = vcmp.lt.s32.totalorder %v257, 240
      %vm259 = vmand %vm258, %vm245
      %vm260 = vcmp.lt.s32.totalorder %v244, 0
      %v261 = vsub.s32 0, %v244
      %v262 = vsel %vm260, %v261, %v244
      %v263 = vshrl.u32 %v262, 4
      %v264 = vand.u32 %v262, 15
      %v265 = vsub.s32 0, %v264
      %v266 = vsel %vm260, %v265, %v264
      %vm267 = vcmp.ne.s32.totalorder %v266, 0
      %vm268 = vcmp.lt.s32.totalorder %v266, 0
      %vm269 = vmand %vm268, %vm267
      %v270 = vadd.s32 %v266, 16
      %v271 = vsel %vm269, %v270, %v266
      %vm272 = vcmp.ne.s32.totalorder %v271, 15
      %vm273 = vmand %vm272, %vm245
      %v274 = vmul.f32 %v213, %v213
      %v275 = vmul.f32 %v214, %v214
      %v276 = vmul.f32 %v215, %v215
      %v277 = vsel %vm259, 1, 0
      %vm278 = vcmp.eq.s32.totalorder %v277, 1
      %v279 = vsel %vm278, %v274, 0.0
      %v280 = vsel %vm278, %v275, 0.0
      %v281 = vsel %vm278, %v276, 0.0
      %v282 = vmul.f32 %v238, %v238
      %v283 = vmul.f32 %v239, %v239
      %v284 = vmul.f32 %v240, %v240
      %v285 = vsel %vm273, 1, 0
      %vm286 = vcmp.eq.s32.totalorder %v285, 1
      %v287 = vsel %vm286, %v282, 0.0
      %v288 = vsel %vm286, %v283, 0.0
      %v289 = vsel %vm286, %v284, 0.0
      %v290 = vadd.f32 %v279, %v280
      %v291 = vadd.f32 %v290, %v281
      %v292 = vmul.f32 %v291, 6.944445e-08
      %v293 = vadd.f32 %v175, %v292
      %v294 = vadd.f32 %v287, %v288
      %v295 = vadd.f32 %v294, %v289
      %v296 = vmul.f32 %v295, 6.944445e-08
      %v297 = vadd.f32 %v293, %v296
      %v298 = vrot.slane %v297, 4
      %v299 = vadd.f32 %v297, %v298
      %v300 = vrot.slane %v299, 2
      %v301 = vadd.f32 %v299, %v300
      %v302 = vrot.slane %v301, 1
      %v303 = vadd.f32 %v301, %v302
      %304 = vst [vmem:[%s156] sm:$0x1] %v303
      %p305 = scmp.lt.s32.totalorder %s13, 1
      %s306 = scalar_select %p305, %s13, 1
      %s307 = scalar_lea.vmem %s2, %s306
      // Predicated region
      $region29: #{multi_loss_pallas.1} parent=27 // pred_check
        %p308 = pneg %p83
      $region30: #{multi_loss_pallas.1} parent=27 // pred_check_branch
        %310 = sbr.rel (%p308) target = $region32
      $region31: #{multi_loss_pallas.1} parent=27 // pred_region
        _
      $region32: #{multi_loss_pallas.1} parent=27 // pred_fallthru
        _
    $region28: #{multi_loss_pallas.1} parent=5 // pred_fallthru
      _
    %p311 = scmp.le.s32.totalorder 2, %s8
    // Predicated region
    $region33: #{multi_loss_pallas.1} parent=5 // pred_check
      %p312 = pneg %p311
    $region34: #{multi_loss_pallas.1} parent=5 // pred_check_branch
      %314 = sbr.rel (%p312) target = $region36
    $region35: #{multi_loss_pallas.1} parent=5 // pred_region
      %s315 = ssub.s32 %s8, 2
      // Predicated region
      $region37: #{multi_loss_pallas.1} parent=35 // pred_check
        %p316 = pneg %p89
      $region38: #{multi_loss_pallas.1} parent=35 // pred_check_branch
        %318 = sbr.rel (%p316) target = $region40
      $region39: #{multi_loss_pallas.1} parent=35 // pred_region
        %p319 = scmp.lt.s32.totalorder %s14, 1
        %s320 = scalar_select %p319, %s14, 1
        %s321 = scalar_lea.vmem %s2, %s320
      $region40: #{multi_loss_pallas.1} parent=35 // pred_fallthru
        _
    $region36: #{multi_loss_pallas.1} parent=5 // pred_fallthru
      _
  $region6: #{multi_loss_pallas.1} parent=0 // loop_footer
    %s12 = sadd.s32 1, %s8
  $region7: #{multi_loss_pallas.1} parent=0 // loop_footer_branch
    %7 = sbr.rel target = $region3
  $region8: #{multi_loss_pallas.1} parent=0 // loop_exit
    _

</llo_original>
